<compile_context>
chip_gen: v5e
topology: v5e:2x2
jax: 0.10.0
libtpu: 0.0.40
codegen_flags: <defaults>
</compile_context>

<pallas_src>
import functools

import jax
import jax.numpy as jnp
from jax.experimental import pallas as pl
from jax.experimental.pallas import tpu as pltpu

EPS = 1e-5      # PyTorch BatchNorm1d default eps
LANE = 128      # TPU lane width


def _round_up(n, m):
    return (n + m - 1) // m * m


def _bn_eval(x, gamma, beta, run_mean, run_var):
    return (x - run_mean) * jax.lax.rsqrt(run_var + EPS) * gamma + beta


# ---------------------------------------------------------------------------
# Kernel
# ---------------------------------------------------------------------------
def ensemble_kernel(
    x_ref,
    w_in_ref, b_in_ref, sc_in_ref, sh_in_ref,
    w_h_ref, b_h_ref, sc_h_ref, sh_h_ref,
    w_out_ref, b_out_ref,
    out_ref,
    *, n_hidden, s_real,
):
    x = x_ref[...]
    cd = x.dtype  # compute dtype for the MXU operands (f32 or bf16)

    # in_layer: Linear -> ReLU -> folded scale/shift (BatchNorm eval; identity if BN disabled)
    h = jnp.dot(x, w_in_ref[...], preferred_element_type=jnp.float32) + b_in_ref[...]
    h = jnp.maximum(h, 0.0)
    h = h * sc_in_ref[...] + sh_in_ref[...]

    # residual hidden blocks
    for l in range(n_hidden):
        t = jnp.dot(h.astype(cd), w_h_ref[l],
                    preferred_element_type=jnp.float32) + b_h_ref[l]
        t = jnp.maximum(t, 0.0)
        t = t * sc_h_ref[l] + sh_h_ref[l]
        h = t + h

    # out_layer: Linear only. Padded ensemble columns (>= s_real) are exactly 0
    # because the padded weight columns / bias entries are zero.
    y = jnp.dot(h.astype(cd), w_out_ref[...],
                preferred_element_type=jnp.float32) + b_out_ref[...]

    bb, s_pad = y.shape
    # mean over the real ensemble columns; zero padding contributes nothing to the sum
    mu = jnp.sum(y, axis=1, keepdims=True) * (1.0 / float(s_real))
    # unbiased variance over the real columns only (mask padded columns)
    col = jax.lax.broadcasted_iota(jnp.int32, (bb, s_pad), 1)
    d = jnp.where(col < s_real, y - mu, 0.0)
    var = jnp.sum(d * d, axis=1, keepdims=True) * (1.0 / float(s_real - 1))
    logvar = jnp.log(var)

    # single lane-dense output slab: column 0 = mu, column 1 = logvar, rest = 0
    ocol = jax.lax.broadcasted_iota(jnp.int32, out_ref.shape, 1)
    out_ref[...] = jnp.where(ocol == 0, mu, jnp.where(ocol == 1, logvar, 0.0))


# ---------------------------------------------------------------------------
# Wrapper (host-side BN fold, lane padding, pallas_call)
# ---------------------------------------------------------------------------
def direct_ensemble_forward(x, params, *, n_layers, n_models, output_dim,
                            block_b=None, compute_dtype=jnp.float32):
    B, D_in = x.shape
    H = params["w_in"].shape[1]
    S = output_dim * n_models
    n_hidden = n_layers - 1
    assert n_hidden >= 1

    # Batch tile: take the whole batch per step when it is small (grid=(1,)),
    # otherwise a large multiple-of-8 tile. Activation VMEM is tiny either way.
    if block_b is None:
        block_b = B if B <= 1024 else 512
    assert B % block_b == 0
    assert block_b == B or block_b % 8 == 0

    # Lane-padded feature dims.
    Dp = _round_up(D_in, LANE)
    Hp = _round_up(H, LANE)
    Sp = _round_up(S, LANE)

    def pad2(a, r, c):
        return jnp.pad(a, ((0, r - a.shape[0]), (0, c - a.shape[1])))

    def pad3(a, r, c):
        return jnp.pad(a, ((0, 0), (0, r - a.shape[1]), (0, c - a.shape[2])))

    # ---- host-side prep: fold eval BatchNorm into scale/shift, zero-pad to lane width ----
    x_p = pad2(x, B, Dp).astype(compute_dtype)

    w_in = pad2(params["w_in"], Dp, Hp).astype(compute_dtype)
    b_in = pad2(params["b_in"], 1, Hp).astype(jnp.float32)
    sc_in = params["g_in"] * jax.lax.rsqrt(params["rv_in"] + EPS)
    sh_in = params["be_in"] - params["rm_in"] * sc_in
    sc_in = pad2(sc_in, 1, Hp).astype(jnp.float32)
    sh_in = pad2(sh_in, 1, Hp).astype(jnp.float32)

    w_h = pad3(params["w_h"], Hp, Hp).astype(compute_dtype)
    b_h = pad3(params["b_h"], 1, Hp).astype(jnp.float32)
    sc_h = params["g_h"] * jax.lax.rsqrt(params["rv_h"] + EPS)
    sh_h = params["be_h"] - params["rm_h"] * sc_h
    sc_h = pad3(sc_h, 1, Hp).astype(jnp.float32)
    sh_h = pad3(sh_h, 1, Hp).astype(jnp.float32)

    w_out = pad2(params["w_out"], Hp, Sp).astype(compute_dtype)
    b_out = pad2(params["b_out"], 1, Sp).astype(jnp.float32)

    # ---- specs ----
    def full_spec(shape):
        zeros = (0,) * len(shape)
        return pl.BlockSpec(shape, lambda i: zeros)

    in_specs = [
        pl.BlockSpec((block_b, Dp), lambda i: (i, 0)),        # x, tiled over batch
        full_spec((Dp, Hp)), full_spec((1, Hp)), full_spec((1, Hp)), full_spec((1, Hp)),
        full_spec((n_hidden, Hp, Hp)), full_spec((n_hidden, 1, Hp)),
        full_spec((n_hidden, 1, Hp)), full_spec((n_hidden, 1, Hp)),
        full_spec((Hp, Sp)), full_spec((1, Sp)),
    ]
    out_specs = pl.BlockSpec((block_b, LANE), lambda i: (i, 0))
    out_shape = jax.ShapeDtypeStruct((B, LANE), jnp.float32)

    # ---- VMEM budget: explicit, sized from the block footprint (safe on v7x's 64 MiB) ----
    wbytes = jnp.dtype(compute_dtype).itemsize
    block_bytes = (
        block_b * Dp * wbytes                                      # x tile
        + (Dp * Hp + n_hidden * Hp * Hp + Hp * Sp) * wbytes        # weights
        + (3 * Hp + 3 * n_hidden * Hp + Sp) * 4                    # biases / scale / shift
        + block_b * LANE * 4                                       # output tile
    )
    vmem_limit = int(min(64 * 2**20, max(16 * 2**20, 4 * block_bytes)))

    kernel = functools.partial(ensemble_kernel, n_hidden=n_hidden, s_real=S)

    out = pl.pallas_call(
        kernel,
        out_shape=out_shape,
        grid_spec=pltpu.PrefetchScalarGridSpec(
            num_scalar_prefetch=0,
            grid=(B // block_b,),
            in_specs=in_specs,
            out_specs=out_specs,
        ),
        compiler_params=pltpu.CompilerParams(
            dimension_semantics=("parallel",),
            vmem_limit_bytes=vmem_limit,
        ),
    )(x_p, w_in, b_in, sc_in, sh_in, w_h, b_h, sc_h, sh_h, w_out, b_out)

    mu = out[:, 0:1]       # == DirectEnsemble.forward(x) in eval mode (n_output=1, idx=None)
    logvar = out[:, 1:2]   # ensemble spread (density-estimate head)
    return mu, logvar


# ---------------------------------------------------------------------------
# Deterministic synthetic parameters + pure-JAX reference
# ---------------------------------------------------------------------------
def init_params(key, input_dim, hidden_dim, output_dim, n_layers, n_models):
    n_hidden = n_layers - 1
    S = output_dim * n_models
    ks = jax.random.split(key, 12)

    def lin(k, fan_in, fan_out):
        bound = 1.0 / jnp.sqrt(fan_in)
        kw, kb = jax.random.split(k)
        w = jax.random.uniform(kw, (fan_in, fan_out), jnp.float32, -bound, bound)
        b = jax.random.uniform(kb, (1, fan_out), jnp.float32, -bound, bound)
        return w, b

    w_in, b_in = lin(ks[0], input_dim, hidden_dim)
    w_h, b_h = [], []
    for l in range(n_hidden):
        w, b = lin(ks[1 + l], hidden_dim, hidden_dim)
        w_h.append(w)
        b_h.append(b)
    w_out, b_out = lin(ks[5], hidden_dim, S)

    # BatchNorm params / running stats (perturbed so the normalization path is non-trivial).
    def bn(k, n, count):
        kg, kb, km, kv = jax.random.split(k, 4)
        g = 1.0 + 0.1 * jax.random.normal(kg, (count, 1, n), jnp.float32)
        be = 0.1 * jax.random.normal(kb, (count, 1, n), jnp.float32)
        rm = 0.1 * jax.random.normal(km, (count, 1, n), jnp.float32)
        rv = 1.0 + 0.1 * jnp.abs(jax.random.normal(kv, (count, 1, n), jnp.float32))
        return g, be, rm, rv

    g_in, be_in, rm_in, rv_in = bn(ks[6], hidden_dim, 1)
    g_h, be_h, rm_h, rv_h = bn(ks[7], hidden_dim, n_hidden)

    return {
        "w_in": w_in, "b_in": b_in,
        "g_in": g_in[0], "be_in": be_in[0], "rm_in": rm_in[0], "rv_in": rv_in[0],
        "w_h": jnp.stack(w_h), "b_h": jnp.stack(b_h),
        "g_h": g_h, "be_h": be_h, "rm_h": rm_h, "rv_h": rv_h,
        "w_out": w_out, "b_out": b_out,
    }


def reference_forward(x, params, *, n_layers, n_models, output_dim):
    """Pure-JAX reference mirroring the PyTorch eval-mode forward (unpadded, unfolded BN)."""
    n_hidden = n_layers - 1
    S = output_dim * n_models
    h = jnp.maximum(x @ params["w_in"] + params["b_in"], 0.0)
    h = _bn_eval(h, params["g_in"], params["be_in"], params["rm_in"], params["rv_in"])
    for l in range(n_hidden):
        t = jnp.maximum(h @ params["w_h"][l] + params["b_h"][l], 0.0)
        t = _bn_eval(t, params["g_h"][l], params["be_h"][l],
                     params["rm_h"][l], params["rv_h"][l])
        h = t + h
    y = h @ params["w_out"] + params["b_out"]
    mu = jnp.mean(y, axis=1, keepdims=True)
    var = jnp.sum((y - mu) ** 2, axis=1, keepdims=True) / float(S - 1)
    return mu, jnp.log(var)


if __name__ == "__main__":
    # Small, module-consistent shapes.
    B, INPUT_DIM, HIDDEN_DIM, OUTPUT_DIM = 16, 16, 32, 4
    N_LAYERS, N_MODELS = 3, 10

    key = jax.random.PRNGKey(0)
    kx, kp = jax.random.split(key)
    x = jax.random.normal(kx, (B, INPUT_DIM), jnp.float32)
    params = init_params(kp, INPUT_DIM, HIDDEN_DIM, OUTPUT_DIM, N_LAYERS, N_MODELS)

    mu, logvar = direct_ensemble_forward(
        x, params, n_layers=N_LAYERS, n_models=N_MODELS, output_dim=OUTPUT_DIM,
    )
    jax.block_until_ready((mu, logvar))

    mu_ref, logvar_ref = reference_forward(
        x, params, n_layers=N_LAYERS, n_models=N_MODELS, output_dim=OUTPUT_DIM,
    )
    assert mu.shape == (B, 1) and logvar.shape == (B, 1)
    assert jnp.allclose(mu, mu_ref, atol=1e-4, rtol=1e-4)
    assert jnp.allclose(logvar, logvar_ref, atol=1e-4, rtol=1e-4)

    print("KERNEL_OK")
</pallas_src>

<mosaic_0001>
module attributes {stable_mosaic.version = 11 : i64} {
  func.func @ensemble_kernel(%arg0: i32, %arg1: memref<16x128xf32, #tpu.memory_space<vmem>>, %arg2: memref<128x128xf32, #tpu.memory_space<vmem>>, %arg3: memref<1x128xf32, #tpu.memory_space<vmem>>, %arg4: memref<1x128xf32, #tpu.memory_space<vmem>>, %arg5: memref<1x128xf32, #tpu.memory_space<vmem>>, %arg6: memref<2x128x128xf32, #tpu.memory_space<vmem>>, %arg7: memref<2x1x128xf32, #tpu.memory_space<vmem>>, %arg8: memref<2x1x128xf32, #tpu.memory_space<vmem>>, %arg9: memref<2x1x128xf32, #tpu.memory_space<vmem>>, %arg10: memref<128x128xf32, #tpu.memory_space<vmem>>, %arg11: memref<1x128xf32, #tpu.memory_space<vmem>>, %arg12: memref<16x128xf32, #tpu.memory_space<vmem>>) attributes {dimension_semantics = [#tpu.dimension_semantics<parallel>], iteration_bounds = array<i64: 1>, scalar_prefetch = 0 : i64, scratch_operands = 0 : i64, tpu.core_type = #tpu.core_type<tc>, window_params = [{transform_indices = @transform_0, window_bounds = array<i64: 16, 128>}, {pipeline_mode = #tpu.pipeline_mode<synchronous>, transform_indices = @transform_1, window_bounds = array<i64: 128, 128>}, {pipeline_mode = #tpu.pipeline_mode<synchronous>, transform_indices = @transform_2, window_bounds = array<i64: 1, 128>}, {pipeline_mode = #tpu.pipeline_mode<synchronous>, transform_indices = @transform_3, window_bounds = array<i64: 1, 128>}, {pipeline_mode = #tpu.pipeline_mode<synchronous>, transform_indices = @transform_4, window_bounds = array<i64: 1, 128>}, {pipeline_mode = #tpu.pipeline_mode<synchronous>, transform_indices = @transform_5, window_bounds = array<i64: 2, 128, 128>}, {pipeline_mode = #tpu.pipeline_mode<synchronous>, transform_indices = @transform_6, window_bounds = array<i64: 2, 1, 128>}, {pipeline_mode = #tpu.pipeline_mode<synchronous>, transform_indices = @transform_7, window_bounds = array<i64: 2, 1, 128>}, {pipeline_mode = #tpu.pipeline_mode<synchronous>, transform_indices = @transform_8, window_bounds = array<i64: 2, 1, 128>}, {pipeline_mode = #tpu.pipeline_mode<synchronous>, transform_indices = @transform_9, window_bounds = array<i64: 128, 128>}, {pipeline_mode = #tpu.pipeline_mode<synchronous>, transform_indices = @transform_10, window_bounds = array<i64: 1, 128>}, {transform_indices = @transform_11, window_bounds = array<i64: 16, 128>}]} {
    %c0 = arith.constant 0 : index
    %c0_0 = arith.constant 0 : index
    %0 = vector.load %arg1[%c0, %c0_0] : memref<16x128xf32, #tpu.memory_space<vmem>>, vector<16x128xf32>
    %c0_1 = arith.constant 0 : index
    %c0_2 = arith.constant 0 : index
    %1 = vector.load %arg2[%c0_1, %c0_2] : memref<128x128xf32, #tpu.memory_space<vmem>>, vector<128x128xf32>
    %cst = arith.constant dense<0.000000e+00> : vector<16x128xf32>
    %2 = tpu.matmul %0, %1, %cst {dimension_numbers = #tpu.dot_dimension_numbers<[1], [0], [0], [1], [0, 0, 1, 1], [], []>} : vector<16x128xf32>, vector<128x128xf32>, vector<16x128xf32> -> vector<16x128xf32>
    %c0_3 = arith.constant 0 : index
    %c0_4 = arith.constant 0 : index
    %3 = vector.load %arg3[%c0_3, %c0_4] : memref<1x128xf32, #tpu.memory_space<vmem>>, vector<1x128xf32>
    %4 = vector.broadcast %3 : vector<1x128xf32> to vector<16x128xf32>
    %5 = arith.addf %2, %4 : vector<16x128xf32>
    %cst_5 = arith.constant 0.000000e+00 : f32
    %6 = vector.broadcast %cst_5 : f32 to vector<16x128xf32>
    %7 = arith.maximumf %5, %6 : vector<16x128xf32>
    %c0_6 = arith.constant 0 : index
    %c0_7 = arith.constant 0 : index
    %8 = vector.load %arg4[%c0_6, %c0_7] : memref<1x128xf32, #tpu.memory_space<vmem>>, vector<1x128xf32>
    %9 = vector.broadcast %8 : vector<1x128xf32> to vector<16x128xf32>
    %10 = arith.mulf %7, %9 : vector<16x128xf32>
    %c0_8 = arith.constant 0 : index
    %c0_9 = arith.constant 0 : index
    %11 = vector.load %arg5[%c0_8, %c0_9] : memref<1x128xf32, #tpu.memory_space<vmem>>, vector<1x128xf32>
    %12 = vector.broadcast %11 : vector<1x128xf32> to vector<16x128xf32>
    %13 = arith.addf %10, %12 : vector<16x128xf32>
    %c0_10 = arith.constant 0 : index
    %c0_11 = arith.constant 0 : index
    %c0_12 = arith.constant 0 : index
    %14 = vector.load %arg6[%c0_10, %c0_11, %c0_12] : memref<2x128x128xf32, #tpu.memory_space<vmem>>, vector<1x128x128xf32>
    %15 = vector.shape_cast %14 : vector<1x128x128xf32> to vector<128x128xf32>
    %cst_13 = arith.constant dense<0.000000e+00> : vector<16x128xf32>
    %16 = tpu.matmul %13, %15, %cst_13 {dimension_numbers = #tpu.dot_dimension_numbers<[1], [0], [0], [1], [0, 0, 1, 1], [], []>} : vector<16x128xf32>, vector<128x128xf32>, vector<16x128xf32> -> vector<16x128xf32>
    %c0_14 = arith.constant 0 : index
    %c0_15 = arith.constant 0 : index
    %c0_16 = arith.constant 0 : index
    %17 = vector.load %arg7[%c0_14, %c0_15, %c0_16] : memref<2x1x128xf32, #tpu.memory_space<vmem>>, vector<1x1x128xf32>
    %18 = vector.shape_cast %17 : vector<1x1x128xf32> to vector<1x128xf32>
    %19 = vector.broadcast %18 : vector<1x128xf32> to vector<16x128xf32>
    %20 = arith.addf %16, %19 : vector<16x128xf32>
    %cst_17 = arith.constant 0.000000e+00 : f32
    %21 = vector.broadcast %cst_17 : f32 to vector<16x128xf32>
    %22 = arith.maximumf %20, %21 : vector<16x128xf32>
    %c0_18 = arith.constant 0 : index
    %c0_19 = arith.constant 0 : index
    %c0_20 = arith.constant 0 : index
    %23 = vector.load %arg8[%c0_18, %c0_19, %c0_20] : memref<2x1x128xf32, #tpu.memory_space<vmem>>, vector<1x1x128xf32>
    %24 = vector.shape_cast %23 : vector<1x1x128xf32> to vector<1x128xf32>
    %25 = vector.broadcast %24 : vector<1x128xf32> to vector<16x128xf32>
    %26 = arith.mulf %22, %25 : vector<16x128xf32>
    %c0_21 = arith.constant 0 : index
    %c0_22 = arith.constant 0 : index
    %c0_23 = arith.constant 0 : index
    %27 = vector.load %arg9[%c0_21, %c0_22, %c0_23] : memref<2x1x128xf32, #tpu.memory_space<vmem>>, vector<1x1x128xf32>
    %28 = vector.shape_cast %27 : vector<1x1x128xf32> to vector<1x128xf32>
    %29 = vector.broadcast %28 : vector<1x128xf32> to vector<16x128xf32>
    %30 = arith.addf %26, %29 : vector<16x128xf32>
    %31 = arith.addf %30, %13 : vector<16x128xf32>
    %c1 = arith.constant 1 : index
    %c0_24 = arith.constant 0 : index
    %c0_25 = arith.constant 0 : index
    %32 = vector.load %arg6[%c1, %c0_24, %c0_25] : memref<2x128x128xf32, #tpu.memory_space<vmem>>, vector<1x128x128xf32>
    %33 = vector.shape_cast %32 : vector<1x128x128xf32> to vector<128x128xf32>
    %cst_26 = arith.constant dense<0.000000e+00> : vector<16x128xf32>
    %34 = tpu.matmul %31, %33, %cst_26 {dimension_numbers = #tpu.dot_dimension_numbers<[1], [0], [0], [1], [0, 0, 1, 1], [], []>} : vector<16x128xf32>, vector<128x128xf32>, vector<16x128xf32> -> vector<16x128xf32>
    %c1_27 = arith.constant 1 : index
    %c0_28 = arith.constant 0 : index
    %c0_29 = arith.constant 0 : index
    %35 = vector.load %arg7[%c1_27, %c0_28, %c0_29] : memref<2x1x128xf32, #tpu.memory_space<vmem>>, vector<1x1x128xf32>
    %36 = vector.shape_cast %35 : vector<1x1x128xf32> to vector<1x128xf32>
    %37 = vector.broadcast %36 : vector<1x128xf32> to vector<16x128xf32>
    %38 = arith.addf %34, %37 : vector<16x128xf32>
    %cst_30 = arith.constant 0.000000e+00 : f32
    %39 = vector.broadcast %cst_30 : f32 to vector<16x128xf32>
    %40 = arith.maximumf %38, %39 : vector<16x128xf32>
    %c1_31 = arith.constant 1 : index
    %c0_32 = arith.constant 0 : index
    %c0_33 = arith.constant 0 : index
    %41 = vector.load %arg8[%c1_31, %c0_32, %c0_33] : memref<2x1x128xf32, #tpu.memory_space<vmem>>, vector<1x1x128xf32>
    %42 = vector.shape_cast %41 : vector<1x1x128xf32> to vector<1x128xf32>
    %43 = vector.broadcast %42 : vector<1x128xf32> to vector<16x128xf32>
    %44 = arith.mulf %40, %43 : vector<16x128xf32>
    %c1_34 = arith.constant 1 : index
    %c0_35 = arith.constant 0 : index
    %c0_36 = arith.constant 0 : index
    %45 = vector.load %arg9[%c1_34, %c0_35, %c0_36] : memref<2x1x128xf32, #tpu.memory_space<vmem>>, vector<1x1x128xf32>
    %46 = vector.shape_cast %45 : vector<1x1x128xf32> to vector<1x128xf32>
    %47 = vector.broadcast %46 : vector<1x128xf32> to vector<16x128xf32>
    %48 = arith.addf %44, %47 : vector<16x128xf32>
    %49 = arith.addf %48, %31 : vector<16x128xf32>
    %c0_37 = arith.constant 0 : index
    %c0_38 = arith.constant 0 : index
    %50 = vector.load %arg10[%c0_37, %c0_38] : memref<128x128xf32, #tpu.memory_space<vmem>>, vector<128x128xf32>
    %cst_39 = arith.constant dense<0.000000e+00> : vector<16x128xf32>
    %51 = tpu.matmul %49, %50, %cst_39 {dimension_numbers = #tpu.dot_dimension_numbers<[1], [0], [0], [1], [0, 0, 1, 1], [], []>} : vector<16x128xf32>, vector<128x128xf32>, vector<16x128xf32> -> vector<16x128xf32>
    %c0_40 = arith.constant 0 : index
    %c0_41 = arith.constant 0 : index
    %52 = vector.load %arg11[%c0_40, %c0_41] : memref<1x128xf32, #tpu.memory_space<vmem>>, vector<1x128xf32>
    %53 = vector.broadcast %52 : vector<1x128xf32> to vector<16x128xf32>
    %54 = arith.addf %51, %53 : vector<16x128xf32>
    %cst_42 = arith.constant dense<0.000000e+00> : vector<16xf32>
    %55 = vector.multi_reduction <add>, %54, %cst_42 [1] : vector<16x128xf32> to vector<16xf32>
    %56 = vector.shape_cast %55 : vector<16xf32> to vector<16x1xf32>
    %cst_43 = arith.constant 2.500000e-02 : f32
    %57 = vector.broadcast %cst_43 : f32 to vector<16x1xf32>
    %58 = arith.mulf %56, %57 : vector<16x1xf32>
    %59 = tpu.iota {dimensions = array<i32: 1>} : vector<16x128xi32>
    %c40_i32 = arith.constant 40 : i32
    %60 = vector.broadcast %c40_i32 : i32 to vector<16x128xi32>
    %61 = arith.cmpi slt, %59, %60 : vector<16x128xi32>
    %62 = vector.broadcast %58 : vector<16x1xf32> to vector<16x128xf32>
    %63 = arith.subf %54, %62 : vector<16x128xf32>
    %cst_44 = arith.constant 0.000000e+00 : f32
    %64 = vector.broadcast %cst_44 : f32 to vector<16x128xf32>
    %65 = arith.select %61, %63, %64 : vector<16x128xi1>, vector<16x128xf32>
    %66 = arith.mulf %65, %65 : vector<16x128xf32>
    %cst_45 = arith.constant dense<0.000000e+00> : vector<16xf32>
    %67 = vector.multi_reduction <add>, %66, %cst_45 [1] : vector<16x128xf32> to vector<16xf32>
    %68 = vector.shape_cast %67 : vector<16xf32> to vector<16x1xf32>
    %cst_46 = arith.constant 0.025641026 : f32
    %69 = vector.broadcast %cst_46 : f32 to vector<16x1xf32>
    %70 = arith.mulf %68, %69 : vector<16x1xf32>
    %71 = math.log %70 : vector<16x1xf32>
    %72 = tpu.iota {dimensions = array<i32: 1>} : vector<16x128xi32>
    %c0_i32 = arith.constant 0 : i32
    %73 = vector.broadcast %c0_i32 : i32 to vector<16x128xi32>
    %74 = arith.cmpi eq, %72, %73 : vector<16x128xi32>
    %c1_i32 = arith.constant 1 : i32
    %75 = vector.broadcast %c1_i32 : i32 to vector<16x128xi32>
    %76 = arith.cmpi eq, %72, %75 : vector<16x128xi32>
    %cst_47 = arith.constant 0.000000e+00 : f32
    %77 = vector.shape_cast %71 : vector<16x1xf32> to vector<16x1xf32>
    %78 = vector.broadcast %77 : vector<16x1xf32> to vector<16x128xf32>
    %79 = vector.broadcast %cst_47 : f32 to vector<16x128xf32>
    %80 = arith.select %76, %78, %79 : vector<16x128xi1>, vector<16x128xf32>
    %81 = vector.shape_cast %58 : vector<16x1xf32> to vector<16x1xf32>
    %82 = vector.broadcast %81 : vector<16x1xf32> to vector<16x128xf32>
    %83 = arith.select %74, %82, %80 : vector<16x128xi1>, vector<16x128xf32>
    %c0_48 = arith.constant 0 : index
    %c0_49 = arith.constant 0 : index
    %84 = vector.load %arg12[%c0_48, %c0_49] : memref<16x128xf32, #tpu.memory_space<vmem>>, vector<16x128xf32>
    tpu.vector_store %arg12[%c0_48, %c0_49], %83 {strides = array<i32>} : memref<16x128xf32, #tpu.memory_space<vmem>>, vector<16x128xf32>,
    return
  }
  func.func @transform_0(%arg0: i32) -> (i32, i32) {
    %c0_i32 = arith.constant 0 : i32
    %c0_i32_0 = arith.constant 0 : i32
    return %arg0, %c0_i32 : i32, i32
  }
  func.func @transform_1(%arg0: i32) -> (i32, i32) {
    %c0_i32 = arith.constant 0 : i32
    %c0_i32_0 = arith.constant 0 : i32
    %c0_i32_1 = arith.constant 0 : i32
    return %c0_i32, %c0_i32_0 : i32, i32
  }
  func.func @transform_2(%arg0: i32) -> (i32, i32) {
    %c0_i32 = arith.constant 0 : i32
    %c0_i32_0 = arith.constant 0 : i32
    %c0_i32_1 = arith.constant 0 : i32
    return %c0_i32, %c0_i32_0 : i32, i32
  }
  func.func @transform_3(%arg0: i32) -> (i32, i32) {
    %c0_i32 = arith.constant 0 : i32
    %c0_i32_0 = arith.constant 0 : i32
    %c0_i32_1 = arith.constant 0 : i32
    return %c0_i32, %c0_i32_0 : i32, i32
  }
  func.func @transform_4(%arg0: i32) -> (i32, i32) {
    %c0_i32 = arith.constant 0 : i32
    %c0_i32_0 = arith.constant 0 : i32
    %c0_i32_1 = arith.constant 0 : i32
    return %c0_i32, %c0_i32_0 : i32, i32
  }
  func.func @transform_5(%arg0: i32) -> (i32, i32, i32) {
    %c0_i32 = arith.constant 0 : i32
    %c0_i32_0 = arith.constant 0 : i32
    %c0_i32_1 = arith.constant 0 : i32
    %c0_i32_2 = arith.constant 0 : i32
    return %c0_i32, %c0_i32_0, %c0_i32_1 : i32, i32, i32
  }
  func.func @transform_6(%arg0: i32) -> (i32, i32, i32) {
    %c0_i32 = arith.constant 0 : i32
    %c0_i32_0 = arith.constant 0 : i32
    %c0_i32_1 = arith.constant 0 : i32
    %c0_i32_2 = arith.constant 0 : i32
    return %c0_i32, %c0_i32_0, %c0_i32_1 : i32, i32, i32
  }
  func.func @transform_7(%arg0: i32) -> (i32, i32, i32) {
    %c0_i32 = arith.constant 0 : i32
    %c0_i32_0 = arith.constant 0 : i32
    %c0_i32_1 = arith.constant 0 : i32
    %c0_i32_2 = arith.constant 0 : i32
    return %c0_i32, %c0_i32_0, %c0_i32_1 : i32, i32, i32
  }
  func.func @transform_8(%arg0: i32) -> (i32, i32, i32) {
    %c0_i32 = arith.constant 0 : i32
    %c0_i32_0 = arith.constant 0 : i32
    %c0_i32_1 = arith.constant 0 : i32
    %c0_i32_2 = arith.constant 0 : i32
    return %c0_i32, %c0_i32_0, %c0_i32_1 : i32, i32, i32
  }
  func.func @transform_9(%arg0: i32) -> (i32, i32) {
    %c0_i32 = arith.constant 0 : i32
    %c0_i32_0 = arith.constant 0 : i32
    %c0_i32_1 = arith.constant 0 : i32
    return %c0_i32, %c0_i32_0 : i32, i32
  }
  func.func @transform_10(%arg0: i32) -> (i32, i32) {
    %c0_i32 = arith.constant 0 : i32
    %c0_i32_0 = arith.constant 0 : i32
    %c0_i32_1 = arith.constant 0 : i32
    return %c0_i32, %c0_i32_0 : i32, i32
  }
  func.func @transform_11(%arg0: i32) -> (i32, i32) {
    %c0_i32 = arith.constant 0 : i32
    %c0_i32_0 = arith.constant 0 : i32
    return %arg0, %c0_i32 : i32, i32
  }
}

</mosaic_0001>

<llo_original>
// kernel: tpu_custom_call.1
$region0: #{tpu_custom_call.1}
  #allocation0 [shape = 'u32[]', space=smem, size = 0x4, offset = 0x4, fixed_abs, tag = 'smem constant byte address 0x4 - core index']
  #allocation1 [shape = 'u32[72,128]{1,0:T(1,128)}', space=vmem, size = 0x9000, scoped, tag = 'internal scratch']
  %s0 = inlined_call_operand.hbm [shape: f32[16,128], index: 0, kind: input, shape index: {}]
  %s1 = inlined_call_operand.hbm [shape: f32[128,128], index: 1, kind: input, shape index: {}]
  %s2 = inlined_call_operand.hbm [shape: f32[1,128], index: 2, kind: input, shape index: {}]
  %s3 = inlined_call_operand.hbm [shape: f32[1,128], index: 3, kind: input, shape index: {}]
  %s4 = inlined_call_operand.hbm [shape: f32[1,128], index: 4, kind: input, shape index: {}]
  %s5 = inlined_call_operand.hbm [shape: f32[2,128,128], index: 5, kind: input, shape index: {}]
  %s6 = inlined_call_operand.vmem [shape: f32[2,1,128], index: 6, kind: input, shape index: {}]
  %s7 = inlined_call_operand.vmem [shape: f32[2,1,128], index: 7, kind: input, shape index: {}]
  %s8 = inlined_call_operand.vmem [shape: f32[2,1,128], index: 8, kind: input, shape index: {}]
  %s9 = inlined_call_operand.hbm [shape: f32[128,128], index: 9, kind: input, shape index: {}]
  %s10 = inlined_call_operand.vmem [shape: f32[1,128], index: 10, kind: input, shape index: {}]
  %s11 = inlined_call_operand.hbm [shape: f32[16,128], index: 11, kind: output, shape index: {}]
  %s12 = sld [smem:[#allocation0]]
  $region82: #{tpu_custom_call.1} parent=0
    _
  %s14 = ssub.s32 1, %s12
  %s15 = scalar_select 0, %s14, %s12
  $region1: #{tpu_custom_call.1} parent=0
    #allocation2 [shape = 'u8[8192]{0}', space=vmem, size = 0x2000, scoped, tag = 'input window, operand 0, single buffered']
    #allocation3 [shape = 's32[1]{0}', space=sflag, size = 0x4, scoped, tag = 'scoped memory for tpu_custom_call.1']
    #allocation4 [shape = 's32[1]{0}', space=sflag, size = 0x4, scoped, tag = 'scoped memory for tpu_custom_call.1']
    #allocation5 [shape = 'u8[65536]{0}', space=vmem, size = 0x10000, scoped, tag = 'input window, operand 1, single buffered']
    #allocation6 [shape = 's32[1]{0}', space=sflag, size = 0x4, scoped, tag = 'scoped memory for tpu_custom_call.1']
    #allocation7 [shape = 'u8[512]{0}', space=vmem, size = 0x400, scoped, tag = 'input window, operand 2, single buffered']
    #allocation8 [shape = 'u8[512]{0}', space=vmem, size = 0x400, scoped, tag = 'input window, operand 3, single buffered']
    #allocation9 [shape = 's32[1]{0}', space=sflag, size = 0x4, scoped, tag = 'scoped memory for tpu_custom_call.1']
    #allocation10 [shape = 'u8[512]{0}', space=vmem, size = 0x400, scoped, tag = 'input window, operand 4, single buffered']
    #allocation11 [shape = 'u8[131072]{0}', space=vmem, size = 0x20000, scoped, tag = 'input window, operand 5, single buffered']
    #allocation12 [shape = 's32[1]{0}', space=sflag, size = 0x4, scoped, tag = 'scoped memory for tpu_custom_call.1']
    #allocation13 [shape = 'u8[65536]{0}', space=vmem, size = 0x10000, scoped, tag = 'input window, operand 9, single buffered']
    #allocation14 [shape = 'u8[8192]{0}', space=vmem, size = 0x2000, scoped, tag = 'output window, operand 0, single buffered']
    %16 = vsyncpa [#allocation3], 0
    %17 = vsyncpa [#allocation6], 0
    %18 = vsyncpa [#allocation9], 0
    %19 = vsyncpa [#allocation12], 0
    %20 = vsyncpa [#allocation4], 0
    // Predicated region
    $region2: #{tpu_custom_call.1} parent=1 // pred_check
      _
    $region3: #{tpu_custom_call.1} parent=1 // pred_check_branch
      %22 = sbr.rel (0) target = $region5
    $region4: #{tpu_custom_call.1} parent=1 // pred_region
      %24 = vsyncadd [#allocation3], 0
      %s25 = sshll.u32 %s0, 4
      %s26 = int_to_ptr.hbm [resolvable:$true] %s25
      %s27 = sshll.u32 [#allocation2], 4
      %s28 = int_to_ptr.vmem [resolvable:$true] %s27
      %33 = dma.hbm_to_vmem [thread:$0]  %s26, 256, %s28, [#allocation3], 128, 128, 8
    $region5: #{tpu_custom_call.1} parent=1 // pred_fallthru
      _
    // Predicated region
    $region6: #{tpu_custom_call.1} parent=1 // pred_check
      _
    $region7: #{tpu_custom_call.1} parent=1 // pred_check_branch
      %35 = sbr.rel (0) target = $region9
    $region8: #{tpu_custom_call.1} parent=1 // pred_region
      %37 = vsyncadd [#allocation6], 0
      %s38 = sshll.u32 %s1, 4
      %s39 = int_to_ptr.hbm [resolvable:$true] %s38
      %s40 = sshll.u32 [#allocation5], 4
      %s41 = int_to_ptr.vmem [resolvable:$true] %s40
      %46 = dma.hbm_to_vmem [thread:$0]  %s39, 2048, %s41, [#allocation6], 128, 128, 8
    $region9: #{tpu_custom_call.1} parent=1 // pred_fallthru
      _
    // Predicated region
    $region10: #{tpu_custom_call.1} parent=1 // pred_check
      _
    $region11: #{tpu_custom_call.1} parent=1 // pred_check_branch
      %48 = sbr.rel (0) target = $region13
    $region12: #{tpu_custom_call.1} parent=1 // pred_region
      %50 = vsyncadd [#allocation6], 0
      %s52 = sshll.u32 %s2, 4
      %s53 = int_to_ptr.hbm [resolvable:$true] %s52
      %s54 = sshll.u32 [#allocation7], 4
      %s55 = int_to_ptr.vmem [resolvable:$true] %s54
      %57 = dma.hbm_to_vmem [thread:$0]  %s53, 16, %s55, [#allocation6]
    $region13: #{tpu_custom_call.1} parent=1 // pred_fallthru
      _
    // Predicated region
    $region14: #{tpu_custom_call.1} parent=1 // pred_check
      _
    $region15: #{tpu_custom_call.1} parent=1 // pred_check_branch
      %59 = sbr.rel (0) target = $region17
    $region16: #{tpu_custom_call.1} parent=1 // pred_region
      %61 = vsyncadd [#allocation9], 0
      %s63 = sshll.u32 %s3, 4
      %s64 = int_to_ptr.hbm [resolvable:$true] %s63
      %s65 = sshll.u32 [#allocation8], 4
      %s66 = int_to_ptr.vmem [resolvable:$true] %s65
      %68 = dma.hbm_to_vmem [thread:$0]  %s64, 16, %s66, [#allocation9]
    $region17: #{tpu_custom_call.1} parent=1 // pred_fallthru
      _
    // Predicated region
    $region18: #{tpu_custom_call.1} parent=1 // pred_check
      _
    $region19: #{tpu_custom_call.1} parent=1 // pred_check_branch
      %70 = sbr.rel (0) target = $region21
    $region20: #{tpu_custom_call.1} parent=1 // pred_region
      %72 = vsyncadd [#allocation9], 0
      %s74 = sshll.u32 %s4, 4
      %s75 = int_to_ptr.hbm [resolvable:$true] %s74
      %s76 = sshll.u32 [#allocation10], 4
      %s77 = int_to_ptr.vmem [resolvable:$true] %s76
      %79 = dma.hbm_to_vmem [thread:$0]  %s75, 16, %s77, [#allocation9]
    $region21: #{tpu_custom_call.1} parent=1 // pred_fallthru
      _
    // Predicated region
    $region22: #{tpu_custom_call.1} parent=1 // pred_check
      _
    $region23: #{tpu_custom_call.1} parent=1 // pred_check_branch
      %81 = sbr.rel (0) target = $region25
    $region24: #{tpu_custom_call.1} parent=1 // pred_region
      %83 = vsyncadd [#allocation12], 0
      %s84 = sshll.u32 %s5, 4
      %s85 = int_to_ptr.hbm [resolvable:$true] %s84
      %s86 = sshll.u32 [#allocation11], 4
      %s87 = int_to_ptr.vmem [resolvable:$true] %s86
      %92 = dma.hbm_to_vmem [thread:$0]  %s85, 4096, %s87, [#allocation12], 128, 128, 8
    $region25: #{tpu_custom_call.1} parent=1 // pred_fallthru
      _
    // Predicated region
    $region26: #{tpu_custom_call.1} parent=1 // pred_check
      _
    $region27: #{tpu_custom_call.1} parent=1 // pred_check_branch
      %94 = sbr.rel (0) target = $region29
    $region28: #{tpu_custom_call.1} parent=1 // pred_region
      _
    $region29: #{tpu_custom_call.1} parent=1 // pred_fallthru
      _
    // Predicated region
    $region30: #{tpu_custom_call.1} parent=1 // pred_check
      _
    $region31: #{tpu_custom_call.1} parent=1 // pred_check_branch
      %96 = sbr.rel (0) target = $region33
    $region32: #{tpu_custom_call.1} parent=1 // pred_region
      _
    $region33: #{tpu_custom_call.1} parent=1 // pred_fallthru
      _
    // Predicated region
    $region34: #{tpu_custom_call.1} parent=1 // pred_check
      _
    $region35: #{tpu_custom_call.1} parent=1 // pred_check_branch
      %98 = sbr.rel (0) target = $region37
    $region36: #{tpu_custom_call.1} parent=1 // pred_region
      _
    $region37: #{tpu_custom_call.1} parent=1 // pred_fallthru
      _
    // Predicated region
    $region38: #{tpu_custom_call.1} parent=1 // pred_check
      _
    $region39: #{tpu_custom_call.1} parent=1 // pred_check_branch
      %100 = sbr.rel (0) target = $region41
    $region40: #{tpu_custom_call.1} parent=1 // pred_region
      %102 = vsyncadd [#allocation12], 0
      %s103 = sshll.u32 %s9, 4
      %s104 = int_to_ptr.hbm [resolvable:$true] %s103
      %s105 = sshll.u32 [#allocation13], 4
      %s106 = int_to_ptr.vmem [resolvable:$true] %s105
      %111 = dma.hbm_to_vmem [thread:$0]  %s104, 2048, %s106, [#allocation12], 128, 128, 8
    $region41: #{tpu_custom_call.1} parent=1 // pred_fallthru
      _
    // Predicated region
    $region42: #{tpu_custom_call.1} parent=1 // pred_check
      _
    $region43: #{tpu_custom_call.1} parent=1 // pred_check_branch
      %113 = sbr.rel (0) target = $region45
    $region44: #{tpu_custom_call.1} parent=1 // pred_region
      _
    $region45: #{tpu_custom_call.1} parent=1 // pred_fallthru
      _
    // Predicated region
    $region46: #{tpu_custom_call.1} parent=1 // pred_check
      _
    $region47: #{tpu_custom_call.1} parent=1 // pred_check_branch
      %115 = sbr.rel (0) target = $region49
    $region48: #{tpu_custom_call.1} parent=1 // pred_region
      %117 = dma.done [#allocation3], 256
    $region49: #{tpu_custom_call.1} parent=1 // pred_fallthru
      _
    // Predicated region
    $region50: #{tpu_custom_call.1} parent=1 // pred_check
      _
    $region51: #{tpu_custom_call.1} parent=1 // pred_check_branch
      %119 = sbr.rel (0) target = $region53
    $region52: #{tpu_custom_call.1} parent=1 // pred_region
      %121 = dma.done [#allocation6], 2048
    $region53: #{tpu_custom_call.1} parent=1 // pred_fallthru
      _
    // Predicated region
    $region54: #{tpu_custom_call.1} parent=1 // pred_check
      _
    $region55: #{tpu_custom_call.1} parent=1 // pred_check_branch
      %123 = sbr.rel (0) target = $region57
    $region56: #{tpu_custom_call.1} parent=1 // pred_region
      %125 = dma.done [#allocation6], 16
    $region57: #{tpu_custom_call.1} parent=1 // pred_fallthru
      _
    // Predicated region
    $region58: #{tpu_custom_call.1} parent=1 // pred_check
      _
    $region59: #{tpu_custom_call.1} parent=1 // pred_check_branch
      %127 = sbr.rel (0) target = $region61
    $region60: #{tpu_custom_call.1} parent=1 // pred_region
      %129 = dma.done [#allocation9], 16
    $region61: #{tpu_custom_call.1} parent=1 // pred_fallthru
      _
    // Predicated region
    $region62: #{tpu_custom_call.1} parent=1 // pred_check
      _
    $region63: #{tpu_custom_call.1} parent=1 // pred_check_branch
      %131 = sbr.rel (0) target = $region65
    $region64: #{tpu_custom_call.1} parent=1 // pred_region
      %133 = dma.done [#allocation9], 16
    $region65: #{tpu_custom_call.1} parent=1 // pred_fallthru
      _
    // Predicated region
    $region66: #{tpu_custom_call.1} parent=1 // pred_check
      _
    $region67: #{tpu_custom_call.1} parent=1 // pred_check_branch
      %135 = sbr.rel (0) target = $region69
    $region68: #{tpu_custom_call.1} parent=1 // pred_region
      %137 = dma.done [#allocation12], 4096
    $region69: #{tpu_custom_call.1} parent=1 // pred_fallthru
      _
    // Predicated region
    $region70: #{tpu_custom_call.1} parent=1 // pred_check
      _
    $region71: #{tpu_custom_call.1} parent=1 // pred_check_branch
      %139 = sbr.rel (0) target = $region73
    $region72: #{tpu_custom_call.1} parent=1 // pred_region
      %141 = dma.done [#allocation12], 2048
    $region73: #{tpu_custom_call.1} parent=1 // pred_fallthru
      _
    %v142 = vld [vmem:[#allocation2] sm:$0xff]
    %v143 = vld [vmem:[#allocation2 + $0x8] sm:$0xff]
    %v144 = vld [vmem:[#allocation5] sm:$0xff]
    %v145 = vld [vmem:[#allocation5 + $0x8] sm:$0xff]
    %v146 = vld [vmem:[#allocation5 + $0x10] sm:$0xff]
    %v147 = vld [vmem:[#allocation5 + $0x18] sm:$0xff]
    %v148 = vld [vmem:[#allocation5 + $0x20] sm:$0xff]
    %v149 = vld [vmem:[#allocation5 + $0x28] sm:$0xff]
    %v150 = vld [vmem:[#allocation5 + $0x30] sm:$0xff]
    %v151 = vld [vmem:[#allocation5 + $0x38] sm:$0xff]
    %v152 = vld [vmem:[#allocation5 + $0x40] sm:$0xff]
    %v153 = vld [vmem:[#allocation5 + $0x48] sm:$0xff]
    %v154 = vld [vmem:[#allocation5 + $0x50] sm:$0xff]
    %v155 = vld [vmem:[#allocation5 + $0x58] sm:$0xff]
    %v156 = vld [vmem:[#allocation5 + $0x60] sm:$0xff]
    %v157 = vld [vmem:[#allocation5 + $0x68] sm:$0xff]
    %v158 = vld [vmem:[#allocation5 + $0x70] sm:$0xff]
    %v159 = vld [vmem:[#allocation5 + $0x78] sm:$0xff]
    %v160 = vld [vmem:[#allocation7] sm:$0x1]
    %v162 = vperm.slane %v160, 0
    %164 = vmatpush.msra.mxu0 %v159
    %165 = vmatpush.msra.mxu0 %v158
    %166 = vmatpush.msra.mxu0 %v157
    %167 = vmatpush.msra.mxu0 %v156
    %168 = vmatpush.msra.mxu0 %v155
    %169 = vmatpush.msra.mxu0 %v154
    %170 = vmatpush.msra.mxu0 %v153
    %171 = vmatpush.msra.mxu0 %v152
    %172 = vmatpush.msra.mxu0 %v151
    %173 = vmatpush.msra.mxu0 %v150
    %174 = vmatpush.msra.mxu0 %v149
    %175 = vmatpush.msra.mxu0 %v148
    %176 = vmatpush.msra.mxu0 %v147
    %177 = vmatpush.msra.mxu0 %v146
    %178 = vmatpush.msra.mxu0 %v145
    %179 = vmatpush.msra.mxu0 %v144
    %180 = vmatmul.f32.gmra.mxu0 %v142
    %v181 = vpop.f32.mrf.mxu0
    %v182 = vadd.f32 %v162, %v181
    %183 = vmatmul.f32.gmra.mxu0 %v143
    %v184 = vpop.f32.mrf.mxu0
    %v185 = vadd.f32 %v162, %v184
    %186 = vdwg.mxu0
    %v187 = vmax.f32 %v182, 0.0
    %v188 = vmax.f32 %v185, 0.0
    %v189 = vld [vmem:[#allocation8] sm:$0x1]
    %v191 = vperm.slane %v189, 0
    %v193 = vmul.f32 %v187, %v191
    %v194 = vmul.f32 %v188, %v191
    %v195 = vld [vmem:[#allocation10] sm:$0x1]
    %v197 = vperm.slane %v195, 0
    %v199 = vadd.f32 %v193, %v197
    %v200 = vadd.f32 %v194, %v197
    %v201 = vld [vmem:[#allocation11] sm:$0xff]
    %v202 = vld [vmem:[#allocation11 + $0x8] sm:$0xff]
    %v203 = vld [vmem:[#allocation11 + $0x10] sm:$0xff]
    %v204 = vld [vmem:[#allocation11 + $0x18] sm:$0xff]
    %v205 = vld [vmem:[#allocation11 + $0x20] sm:$0xff]
    %v206 = vld [vmem:[#allocation11 + $0x28] sm:$0xff]
    %v207 = vld [vmem:[#allocation11 + $0x30] sm:$0xff]
    %v208 = vld [vmem:[#allocation11 + $0x38] sm:$0xff]
    %v209 = vld [vmem:[#allocation11 + $0x40] sm:$0xff]
    %v210 = vld [vmem:[#allocation11 + $0x48] sm:$0xff]
    %v211 = vld [vmem:[#allocation11 + $0x50] sm:$0xff]
    %v212 = vld [vmem:[#allocation11 + $0x58] sm:$0xff]
    %v213 = vld [vmem:[#allocation11 + $0x60] sm:$0xff]
    %v214 = vld [vmem:[#allocation11 + $0x68] sm:$0xff]
    %v215 = vld [vmem:[#allocation11 + $0x70] sm:$0xff]
    %v216 = vld [vmem:[#allocation11 + $0x78] sm:$0xff]
    %v217 = vld [vmem:[%s6] sm:$0x1]
    %v219 = vperm.slane %v217, 0
    %221 = vmatpush.msra.mxu0 %v216
    %222 = vmatpush.msra.mxu0 %v215
    %223 = vmatpush.msra.mxu0 %v214
    %224 = vmatpush.msra.mxu0 %v213
    %225 = vmatpush.msra.mxu0 %v212
    %226 = vmatpush.msra.mxu0 %v211
    %227 = vmatpush.msra.mxu0 %v210
    %228 = vmatpush.msra.mxu0 %v209
    %229 = vmatpush.msra.mxu0 %v208
    %230 = vmatpush.msra.mxu0 %v207
    %231 = vmatpush.msra.mxu0 %v206
    %232 = vmatpush.msra.mxu0 %v205
    %233 = vmatpush.msra.mxu0 %v204
    %234 = vmatpush.msra.mxu0 %v203
    %235 = vmatpush.msra.mxu0 %v202
    %236 = vmatpush.msra.mxu0 %v201
    %237 = vmatmul.f32.gmra.mxu0 %v199
    %v238 = vpop.f32.mrf.mxu0
    %v239 = vadd.f32 %v219, %v238
    %240 = vmatmul.f32.gmra.mxu0 %v200
    %v241 = vpop.f32.mrf.mxu0
    %v242 = vadd.f32 %v219, %v241
    %243 = vdwg.mxu0
    %v244 = vmax.f32 %v239, 0.0
    %v245 = vmax.f32 %v242, 0.0
    %v246 = vld [vmem:[%s7] sm:$0x1]
    %v248 = vperm.slane %v246, 0
    %v250 = vmul.f32 %v244, %v248
    %v251 = vmul.f32 %v245, %v248
    %v252 = vld [vmem:[%s8] sm:$0x1]
    %v254 = vperm.slane %v252, 0
    %v256 = vadd.f32 %v250, %v254
    %v257 = vadd.f32 %v251, %v254
    %v258 = vadd.f32 %v256, %v199
    %v259 = vadd.f32 %v257, %v200
    %s260 = scalar_lea.vmem [#allocation11], 128
    %v261 = vld [vmem:[%s260] sm:$0xff]
    %v262 = vld [vmem:[%s260 + $0x8] sm:$0xff]
    %v263 = vld [vmem:[%s260 + $0x10] sm:$0xff]
    %v264 = vld [vmem:[%s260 + $0x18] sm:$0xff]
    %v265 = vld [vmem:[%s260 + $0x20] sm:$0xff]
    %v266 = vld [vmem:[%s260 + $0x28] sm:$0xff]
    %v267 = vld [vmem:[%s260 + $0x30] sm:$0xff]
    %v268 = vld [vmem:[%s260 + $0x38] sm:$0xff]
    %v269 = vld [vmem:[%s260 + $0x40] sm:$0xff]
    %v270 = vld [vmem:[%s260 + $0x48] sm:$0xff]
    %v271 = vld [vmem:[%s260 + $0x50] sm:$0xff]
    %v272 = vld [vmem:[%s260 + $0x58] sm:$0xff]
    %v273 = vld [vmem:[%s260 + $0x60] sm:$0xff]
    %v274 = vld [vmem:[%s260 + $0x68] sm:$0xff]
    %v275 = vld [vmem:[%s260 + $0x70] sm:$0xff]
    %v276 = vld [vmem:[%s260 + $0x78] sm:$0xff]
    %s277 = scalar_lea.vmem %s6, 1
    %v278 = vld [vmem:[%s277] sm:$0x1]
    %v280 = vperm.slane %v278, 0
    %282 = vmatpush.msra.mxu0 %v276
    %283 = vmatpush.msra.mxu0 %v275
    %284 = vmatpush.msra.mxu0 %v274
    %285 = vmatpush.msra.mxu0 %v273
    %286 = vmatpush.msra.mxu0 %v272
    %287 = vmatpush.msra.mxu0 %v271
    %288 = vmatpush.msra.mxu0 %v270
    %289 = vmatpush.msra.mxu0 %v269
    %290 = vmatpush.msra.mxu0 %v268
    %291 = vmatpush.msra.mxu0 %v267
    %292 = vmatpush.msra.mxu0 %v266
    %293 = vmatpush.msra.mxu0 %v265
    %294 = vmatpush.msra.mxu0 %v264
    %295 = vmatpush.msra.mxu0 %v263
    %296 = vmatpush.msra.mxu0 %v262
    %297 = vmatpush.msra.mxu0 %v261
    %298 = vmatmul.f32.gmra.mxu0 %v258
    %v299 = vpop.f32.mrf.mxu0
    %v300 = vadd.f32 %v280, %v299
    %301 = vmatmul.f32.gmra.mxu0 %v259
    %v302 = vpop.f32.mrf.mxu0
    %v303 = vadd.f32 %v280, %v302
    %304 = vdwg.mxu0
    %v305 = vmax.f32 %v300, 0.0
    %v306 = vmax.f32 %v303, 0.0
    %s307 = scalar_lea.vmem %s7, 1
    %v308 = vld [vmem:[%s307] sm:$0x1]
    %v310 = vperm.slane %v308, 0
    %v312 = vmul.f32 %v305, %v310
    %v313 = vmul.f32 %v306, %v310
    %s314 = scalar_lea.vmem %s8, 1
    %v315 = vld [vmem:[%s314] sm:$0x1]
    %v317 = vperm.slane %v315, 0
    %v319 = vadd.f32 %v312, %v317
    %v320 = vadd.f32 %v313, %v317
    %v321 = vadd.f32 %v319, %v258
    %v322 = vadd.f32 %v320, %v259
    %v323 = vld [vmem:[#allocation13] sm:$0xff]
    %v324 = vld [vmem:[#allocation13 + $0x8] sm:$0xff]
    %v325 = vld [vmem:[#allocation13 + $0x10] sm:$0xff]
    %v326 = vld [vmem:[#allocation13 + $0x18] sm:$0xff]
    %v327 = vld [vmem:[#allocation13 + $0x20] sm:$0xff]
    %v328 = vld [vmem:[#allocation13 + $0x28] sm:$0xff]
    %v329 = vld [vmem:[#allocation13 + $0x30] sm:$0xff]
    %v330 = vld [vmem:[#allocation13 + $0x38] sm:$0xff]
    %v331 = vld [vmem:[#allocation13 + $0x40] sm:$0xff]
    %v332 = vld [vmem:[#allocation13 + $0x48] sm:$0xff]
    %v333 = vld [vmem:[#allocation13 + $0x50] sm:$0xff]
    %v334 = vld [vmem:[#allocation13 + $0x58] sm:$0xff]
    %v335 = vld [vmem:[#allocation13 + $0x60] sm:$0xff]
    %v336 = vld [vmem:[#allocation13 + $0x68] sm:$0xff]
    %v337 = vld [vmem:[#allocation13 + $0x70] sm:$0xff]
    %v338 = vld [vmem:[#allocation13 + $0x78] sm:$0xff]
    %v339 = vld [vmem:[%s10] sm:$0x1]
    %v341 = vperm.slane %v339, 0
    %343 = vmatpush.msra.mxu0 %v338
    %344 = vmatpush.msra.mxu0 %v337
    %345 = vmatpush.msra.mxu0 %v336
    %346 = vmatpush.msra.mxu0 %v335
    %347 = vmatpush.msra.mxu0 %v334
    %348 = vmatpush.msra.mxu0 %v333
    %349 = vmatpush.msra.mxu0 %v332
    %350 = vmatpush.msra.mxu0 %v331
    %351 = vmatpush.msra.mxu0 %v330
    %352 = vmatpush.msra.mxu0 %v329
    %353 = vmatpush.msra.mxu0 %v328
    %354 = vmatpush.msra.mxu0 %v327
    %355 = vmatpush.msra.mxu0 %v326
    %356 = vmatpush.msra.mxu0 %v325
    %357 = vmatpush.msra.mxu0 %v324
    %358 = vmatpush.msra.mxu0 %v323
    %359 = vmatmul.f32.gmra.mxu0 %v321
    %v360 = vpop.f32.mrf.mxu0
    %v361 = vadd.f32 %v341, %v360
    %362 = vmatmul.f32.gmra.mxu0 %v322
    %v363 = vpop.f32.mrf.mxu0
    %v364 = vadd.f32 %v341, %v363
    %365 = vdwg.mxu0
    %366 = vadd.xlane.f32.xlu0 %v361
    %v367 = vpop.xlane.xlu0 %366
    %368 = vadd.xlane.f32.xlu0 %v364
    %v369 = vpop.xlane.xlu0 %368
    %v370 = vmul.f32 %v367, 0.025
    %v371 = vmul.f32 %v369, 0.025
    %v372 = vlaneseq
    %v373 = vand.u32 %v372, 127
    %vm374 = vcmp.lt.s32.totalorder %v373, 40
    %v375 = vsub.f32 %v361, %v370
    %v376 = vsub.f32 %v364, %v371
    %v377 = vsel %vm374, %v375, 0.0
    %v378 = vsel %vm374, %v376, 0.0
    %v379 = vmul.f32 %v377, %v377
    %v380 = vmul.f32 %v378, %v378
    %381 = vadd.xlane.f32.xlu0 %v379
    %v382 = vpop.xlane.xlu0 %381
    %383 = vadd.xlane.f32.xlu0 %v380
    %v384 = vpop.xlane.xlu0 %383
    %v385 = vmul.f32 %v382, 0.025641026
    %v386 = vmul.f32 %v384, 0.025641026
    %v387 = vlog2.pop %v385
    %v388 = vmul.f32 %v387, 0.6931472
    %v389 = vlog2.pop %v386
    %v390 = vmul.f32 %v389, 0.6931472
    %vm391 = vcmp.eq.s32.totalorder %v373, 0
    %vm392 = vcmp.eq.s32.totalorder %v373, 1
    %v393 = vsel %vm392, %v388, 0.0
    %v394 = vsel %vm392, %v390, 0.0
    %v395 = vsel %vm391, %v370, %v393
    %v396 = vsel %vm391, %v371, %v394
    %397 = vst [vmem:[#allocation14] sm:$0xff] %v395
    %398 = vst [vmem:[#allocation14 + $0x8] sm:$0xff] %v396
    // Predicated region
    $region74: #{tpu_custom_call.1} parent=1 // pred_check
      _
    $region75: #{tpu_custom_call.1} parent=1 // pred_check_branch
      %400 = sbr.rel (0) target = $region77
    $region76: #{tpu_custom_call.1} parent=1 // pred_region
      %402 = vsyncadd [#allocation4], 0
      %s403 = sshll.u32 [#allocation14], 4
      %s404 = int_to_ptr.vmem [resolvable:$true] %s403
      %s405 = sshll.u32 %s11, 4
      %s406 = int_to_ptr.hbm [resolvable:$true] %s405
      %411 = dma.vmem_to_hbm [thread:$0]  %s404, 256, %s406, [#allocation4], 128, 128, 8
    $region77: #{tpu_custom_call.1} parent=1 // pred_fallthru
      _
    // Predicated region
    $region78: #{tpu_custom_call.1} parent=1 // pred_check
      _
    $region79: #{tpu_custom_call.1} parent=1 // pred_check_branch
      %413 = sbr.rel (0) target = $region81
    $region80: #{tpu_custom_call.1} parent=1 // pred_region
      %415 = dma.done [#allocation4], 256
    $region81: #{tpu_custom_call.1} parent=1 // pred_fallthru
      _
    %416 = vsyncpa [#allocation3], 1
    %417 = vsyncpa [#allocation6], 1
    %418 = vsyncpa [#allocation9], 1
    %419 = vsyncpa [#allocation12], 1
    %420 = vsyncpa [#allocation4], 1

</llo_original>
